<compile_context>
chip_gen: v7x
topology: tpu7x:2x2x1
jax: 0.10.0
libtpu: 0.0.40
codegen_flags: <defaults>
</compile_context>

<pallas_src>
import jax
import jax.numpy as jnp
from jax import lax
from jax.experimental import pallas as pl
from jax.experimental.pallas import tpu as pltpu

# Small, module-consistent shapes.
B = 2                       # batch
S = 8                       # seq_len
D = 32                      # d_model
CW = 5                      # context_window
CW_PAD = 8                  # windows padded to 8 lanes (extra lanes hit zero weight rows)
H1 = D // 2                 # anomaly_encoder hidden width = 16
NUM_HEADS = 4
HEAD_DIM = D // NUM_HEADS   # 8
BS = B * S                  # 16
HB = NUM_HEADS * BS         # 64  (head-stacked key axis)

# ---- constant-slab row layout (single [_ROWS, _LANES] f32 slab, packed once at init) ----
_W_OFF = 0                  # 6 weight blocks of D rows each, lanes 0:D
#   block 0: W1^T  ([CW, H1], zero-padded)      block 3: Wk^T
#   block 1: W2^T  ([H1, D],  zero-padded)      block 4: Wv^T
#   block 2: Wq^T * 1/sqrt(head_dim)            block 5: Wo^T
_SEG_OFF = 6 * D            # 192: head-broadcast matrix  [HB, D]  (row h*BS is head-h lane mask)
_NM_OFF = _SEG_OFF + HB     # 256: additive batch mask    [BS, HB] (0 / -1e30)
_B_OFF = _NM_OFF + BS       # 272: bias rows, one every 8 sublanes: b1(pad), b2, bq*scale, bk, bv, bo
_ROWS = _B_OFF + 8 * 6      # 320
_LANES = HB                 # 64


def context_enhancer_kernel(c_ref, x_ref, win_ref, out_ref):
    """Single invocation: anomaly-encoder MLP + fused 4-head cross-attention + residual.

    c_ref   : [320, 64]  constant slab (weights, biases, head/batch masks) - packed at init
    x_ref   : [BS, D]    sequence, batch-major flattened
    win_ref : [BS, CW_PAD] zero-padded anomaly context windows
    out_ref : [BS, D]    enhanced sequence
    """
    f32 = jnp.float32
    x = x_ref[...]                                            # [BS, D]
    win = win_ref[...]                                        # [BS, CW_PAD]

    def wmat(m):                                              # weight block m -> [D, D]
        return c_ref[_W_OFF + m * D:_W_OFF + (m + 1) * D, 0:D]

    def brow(r, width=D):                                     # bias row r -> [1, width]
        return c_ref[_B_OFF + 8 * r:_B_OFF + 8 * r + 1, 0:width]

    # ---- anomaly_encoder: Linear(CW, H1) -> ReLU -> Linear(H1, D) -> Tanh
    w1t = c_ref[_W_OFF:_W_OFF + CW_PAD, 0:H1]                 # [CW_PAD, H1]; rows >= CW are zero
    h1 = jnp.dot(win, w1t, preferred_element_type=f32) + brow(0, H1)
    h1 = jnp.maximum(h1, 0.0)                                 # [BS, H1]
    w2t = c_ref[_W_OFF + D:_W_OFF + D + H1, 0:D]              # [H1, D]
    feat = jnp.tanh(jnp.dot(h1, w2t, preferred_element_type=f32) + brow(1))   # [BS, D]

    # ---- MHA projections (1/sqrt(head_dim) pre-folded into Wq / bq at init)
    q = jnp.dot(x, wmat(2), preferred_element_type=f32) + brow(2)     # [BS, D]
    k = jnp.dot(feat, wmat(3), preferred_element_type=f32) + brow(3)  # [BS, D]
    v = jnp.dot(feat, wmat(4), preferred_element_type=f32) + brow(4)  # [BS, D]

    # ---- fused attention over all (head, key) pairs.
    # Head-masked sublane-stacked K / V: row h*BS + j holds k[j]/v[j] with only head-h lanes kept.
    seg = c_ref[_SEG_OFF:_SEG_OFF + HB, 0:D]                  # [HB, D] constant head-broadcast
    hmask = [c_ref[_SEG_OFF + h * BS:_SEG_OFF + h * BS + 1, 0:D] for h in range(NUM_HEADS)]
    k_packed = jnp.concatenate([k * hmask[h] for h in range(NUM_HEADS)], axis=0)   # [HB, D]
    v_packed = jnp.concatenate([v * hmask[h] for h in range(NUM_HEADS)], axis=0)   # [HB, D]

    # One score matmul for all heads: s[i, h*BS + j] = <q_i, k_j>_headh (already scaled).
    neg_mask = c_ref[_NM_OFF:_NM_OFF + BS, 0:HB]              # [BS, HB] additive 0 / -1e30
    s = lax.dot_general(q, k_packed, (((1,), (1,)), ((), ())),
                        preferred_element_type=f32) + neg_mask           # [BS, HB]

    # Row-global max (valid entries only; masked cols are <= -1e30 and underflow to exactly 0).
    m = jnp.max(s, axis=-1, keepdims=True)
    e = jnp.exp(s - m)                                        # [BS, HB]

    # Unnormalised per-head outputs land in disjoint lanes; per-head denominators broadcast
    # to those same lanes via a constant matmul -> no lane concatenation / reshapes.
    u = jnp.dot(e, v_packed, preferred_element_type=f32)      # [BS, D]
    den = jnp.dot(e, seg, preferred_element_type=f32)         # [BS, D] (>0: 8 same-batch keys/head)
    inv = pl.reciprocal(den, approx=True)                     # EUP
    inv = inv * (2.0 - den * inv)                             # one Newton step -> ~f32 exact
    attn = u * inv                                            # [BS, D]

    out_ref[...] = jnp.dot(attn, wmat(5), preferred_element_type=f32) + brow(5) + x


def make_params(key):
    """Deterministic synthetic parameters with the module's shapes (not a checkpoint)."""
    ks = jax.random.split(key, 8)
    std = 0.1
    return dict(
        enc_w1=jax.random.normal(ks[0], (H1, CW), jnp.float32) * std,     # Linear(CW, H1)
        enc_b1=jax.random.normal(ks[1], (H1,), jnp.float32) * std,
        enc_w2=jax.random.normal(ks[2], (D, H1), jnp.float32) * std,      # Linear(H1, D)
        enc_b2=jax.random.normal(ks[3], (D,), jnp.float32) * std,
        in_proj_w=jax.random.normal(ks[4], (3 * D, D), jnp.float32) * std,   # MHA in_proj
        in_proj_b=jax.random.normal(ks[5], (3 * D,), jnp.float32) * std,
        out_proj_w=jax.random.normal(ks[6], (D, D), jnp.float32) * std,      # MHA out_proj
        out_proj_b=jax.random.normal(ks[7], (D,), jnp.float32) * std,
    )


def pack_params(params):
    """One-time packing (init): builds the constant slab and the window-gather matrix."""
    scale = 1.0 / (HEAD_DIM ** 0.5)
    wq, wk, wv = jnp.split(params["in_proj_w"], 3, axis=0)
    bq, bk, bv = jnp.split(params["in_proj_b"], 3)

    c = jnp.zeros((_ROWS, _LANES), jnp.float32)

    # weight blocks (pre-transposed for x @ W), zero-padded to [D, D]
    blocks = [
        params["enc_w1"].T,          # [CW, H1]
        params["enc_w2"].T,          # [H1, D]
        wq.T * scale,                # scale pre-folded
        wk.T,
        wv.T,
        params["out_proj_w"].T,
    ]
    for m, mat in enumerate(blocks):
        r, cd = mat.shape
        c = c.at[_W_OFF + m * D:_W_OFF + m * D + r, 0:cd].set(mat)

    # head-broadcast matrix: seg[h*BS + j, d] = 1 iff d belongs to head h
    seg = (jnp.arange(HB)[:, None] // BS == jnp.arange(D)[None, :] // HEAD_DIM).astype(jnp.float32)
    c = c.at[_SEG_OFF:_SEG_OFF + HB, 0:D].set(seg)

    # additive batch mask on the fused score matrix: column x = h*BS + j, j = b_k*S + pos
    qb = jnp.arange(BS)[:, None] // S
    kb = (jnp.arange(HB)[None, :] % BS) // S
    c = c.at[_NM_OFF:_NM_OFF + BS, 0:HB].set(jnp.where(qb == kb, 0.0, -1e30).astype(jnp.float32))

    # bias rows (one per 8 sublanes): b1(pad), b2, bq*scale, bk, bv, bo
    biases = [
        jnp.pad(params["enc_b1"], (0, D - H1)),
        params["enc_b2"],
        bq * scale,
        bk,
        bv,
        params["out_proj_b"],
    ]
    for r, bvec in enumerate(biases):
        c = c.at[_B_OFF + 8 * r, 0:D].set(bvec)

    # window-gather 0/1 matrix G [S, S*CW_PAD]: (p @ G).reshape(BS, CW_PAD) reproduces the
    # left-aligned, boundary-clipped, zero-padded windows of the torch loop exactly.
    g = jnp.zeros((S, S * CW_PAD), jnp.float32)
    half = CW // 2
    for i in range(S):
        s0 = max(0, i - half)
        e0 = min(S, i + half + 1)
        for cc in range(e0 - s0):
            g = g.at[s0 + cc, i * CW_PAD + cc].set(1.0)

    return dict(cpack=c, gmat=g)


@jax.jit
def context_enhancer(sequence, anomaly_probs, cpack, gmat):
    """sequence: [B, S, D] f32, anomaly_probs: [B, S] f32 -> enhanced sequence [B, S, D]."""
    x = sequence.astype(jnp.float32).reshape(BS, D)
    # Zero-padded context-window gather as ONE 0/1 matmul + free contiguous reshape
    # (pure data movement; all module arithmetic runs inside the kernel).
    win = jnp.dot(anomaly_probs.astype(jnp.float32), gmat).reshape(BS, CW_PAD)

    out = pl.pallas_call(
        context_enhancer_kernel,
        out_shape=jax.ShapeDtypeStruct((BS, D), jnp.float32),
        in_specs=[pl.BlockSpec(memory_space=pltpu.MemorySpace.VMEM)] * 3,
        out_specs=pl.BlockSpec(memory_space=pltpu.MemorySpace.VMEM),
    )(cpack, x, win)

    return out.reshape(B, S, D)


def reference(sequence, anomaly_probs, params):
    """Pure-JAX reference mirroring the PyTorch module (highest matmul precision)."""
    HI = lax.Precision.HIGHEST
    half = CW // 2
    ctx = []
    for i in range(S):
        s0 = max(0, i - half)
        e0 = min(S, i + half + 1)
        w = jnp.zeros((B, CW), jnp.float32).at[:, : e0 - s0].set(anomaly_probs[:, s0:e0])
        ctx.append(w)
    ctx = jnp.stack(ctx, axis=1)                                               # [B, S, CW]
    h1 = jax.nn.relu(jnp.einsum("bsc,hc->bsh", ctx, params["enc_w1"], precision=HI)
                     + params["enc_b1"])
    feat = jnp.tanh(jnp.einsum("bsh,dh->bsd", h1, params["enc_w2"], precision=HI)
                    + params["enc_b2"])
    wq, wk, wv = jnp.split(params["in_proj_w"], 3, axis=0)
    bq, bk, bv = jnp.split(params["in_proj_b"], 3)
    q = jnp.einsum("bsd,ed->bse", sequence, wq, precision=HI) + bq
    k = jnp.einsum("bsd,ed->bse", feat, wk, precision=HI) + bk
    v = jnp.einsum("bsd,ed->bse", feat, wv, precision=HI) + bv
    split = lambda t: t.reshape(B, S, NUM_HEADS, HEAD_DIM).transpose(0, 2, 1, 3)
    qh, kh, vh = split(q), split(k), split(v)
    s = jnp.einsum("bhqd,bhkd->bhqk", qh, kh, precision=HI) / (HEAD_DIM ** 0.5)
    a = jax.nn.softmax(s, axis=-1)
    o = jnp.einsum("bhqk,bhkd->bhqd", a, vh, precision=HI).transpose(0, 2, 1, 3).reshape(B, S, D)
    attn = jnp.einsum("bsd,ed->bse", o, params["out_proj_w"], precision=HI) + params["out_proj_b"]
    return attn + sequence


if __name__ == "__main__":
    key = jax.random.PRNGKey(0)
    k_seq, k_prob, k_par = jax.random.split(key, 3)

    sequence = jax.random.normal(k_seq, (B, S, D), jnp.float32)
    anomaly_probs = jax.random.uniform(k_prob, (B, S), jnp.float32)
    params = make_params(k_par)

    packed = pack_params(params)   # init-time packing: NOT in the per-call jitted path

    out = context_enhancer(sequence, anomaly_probs, packed["cpack"], packed["gmat"])
    out = jax.block_until_ready(out)

    ref = reference(sequence, anomaly_probs, params)
    assert out.shape == (B, S, D)
    max_err = float(jnp.max(jnp.abs(out - ref)))
    assert jnp.allclose(out, ref, atol=1e-3, rtol=1e-3), f"output mismatch, max abs err {max_err}"

    print("KERNEL_OK")
</pallas_src>

<mosaic_0001>
module attributes {stable_mosaic.version = 11 : i64} {
  func.func @context_enhancer_kernel(%arg0: memref<320x64xf32, #tpu.memory_space<vmem>>, %arg1: memref<16x32xf32, #tpu.memory_space<vmem>>, %arg2: memref<16x8xf32, #tpu.memory_space<vmem>>, %arg3: memref<16x32xf32, #tpu.memory_space<vmem>>) attributes {dimension_semantics = [], scalar_prefetch = 0 : i64, scratch_operands = 0 : i64, tpu.core_type = #tpu.core_type<tc>} {
    %c0 = arith.constant 0 : index
    %c0_0 = arith.constant 0 : index
    %0 = vector.load %arg1[%c0, %c0_0] : memref<16x32xf32, #tpu.memory_space<vmem>>, vector<16x32xf32>
    %c0_1 = arith.constant 0 : index
    %c0_2 = arith.constant 0 : index
    %1 = vector.load %arg2[%c0_1, %c0_2] : memref<16x8xf32, #tpu.memory_space<vmem>>, vector<16x8xf32>
    %c0_3 = arith.constant 0 : index
    %c0_4 = arith.constant 0 : index
    %2 = vector.load %arg0[%c0_3, %c0_4] : memref<320x64xf32, #tpu.memory_space<vmem>>, vector<8x16xf32>
    %cst = arith.constant dense<0.000000e+00> : vector<16x16xf32>
    %3 = tpu.matmul %1, %2, %cst {dimension_numbers = #tpu.dot_dimension_numbers<[1], [0], [0], [1], [0, 0, 1, 1], [], []>} : vector<16x8xf32>, vector<8x16xf32>, vector<16x16xf32> -> vector<16x16xf32>
    %c272 = arith.constant 272 : index
    %c0_5 = arith.constant 0 : index
    %4 = vector.load %arg0[%c272, %c0_5] : memref<320x64xf32, #tpu.memory_space<vmem>>, vector<1x16xf32>
    %5 = vector.broadcast %4 : vector<1x16xf32> to vector<16x16xf32>
    %6 = arith.addf %3, %5 : vector<16x16xf32>
    %cst_6 = arith.constant 0.000000e+00 : f32
    %7 = vector.broadcast %cst_6 : f32 to vector<16x16xf32>
    %8 = arith.maximumf %6, %7 : vector<16x16xf32>
    %c32 = arith.constant 32 : index
    %c0_7 = arith.constant 0 : index
    %9 = vector.load %arg0[%c32, %c0_7] : memref<320x64xf32, #tpu.memory_space<vmem>>, vector<16x32xf32>
    %cst_8 = arith.constant dense<0.000000e+00> : vector<16x32xf32>
    %10 = tpu.matmul %8, %9, %cst_8 {dimension_numbers = #tpu.dot_dimension_numbers<[1], [0], [0], [1], [0, 0, 1, 1], [], []>} : vector<16x16xf32>, vector<16x32xf32>, vector<16x32xf32> -> vector<16x32xf32>
    %c280 = arith.constant 280 : index
    %c0_9 = arith.constant 0 : index
    %11 = vector.load %arg0[%c280, %c0_9] : memref<320x64xf32, #tpu.memory_space<vmem>>, vector<1x32xf32>
    %12 = vector.broadcast %11 : vector<1x32xf32> to vector<16x32xf32>
    %13 = arith.addf %10, %12 : vector<16x32xf32>
    %14 = math.tanh %13 : vector<16x32xf32>
    %c64 = arith.constant 64 : index
    %c0_10 = arith.constant 0 : index
    %15 = vector.load %arg0[%c64, %c0_10] : memref<320x64xf32, #tpu.memory_space<vmem>>, vector<32x32xf32>
    %cst_11 = arith.constant dense<0.000000e+00> : vector<16x32xf32>
    %16 = tpu.matmul %0, %15, %cst_11 {dimension_numbers = #tpu.dot_dimension_numbers<[1], [0], [0], [1], [0, 0, 1, 1], [], []>} : vector<16x32xf32>, vector<32x32xf32>, vector<16x32xf32> -> vector<16x32xf32>
    %c288 = arith.constant 288 : index
    %c0_12 = arith.constant 0 : index
    %17 = vector.load %arg0[%c288, %c0_12] : memref<320x64xf32, #tpu.memory_space<vmem>>, vector<1x32xf32>
    %18 = vector.broadcast %17 : vector<1x32xf32> to vector<16x32xf32>
    %19 = arith.addf %16, %18 : vector<16x32xf32>
    %c96 = arith.constant 96 : index
    %c0_13 = arith.constant 0 : index
    %20 = vector.load %arg0[%c96, %c0_13] : memref<320x64xf32, #tpu.memory_space<vmem>>, vector<32x32xf32>
    %cst_14 = arith.constant dense<0.000000e+00> : vector<16x32xf32>
    %21 = tpu.matmul %14, %20, %cst_14 {dimension_numbers = #tpu.dot_dimension_numbers<[1], [0], [0], [1], [0, 0, 1, 1], [], []>} : vector<16x32xf32>, vector<32x32xf32>, vector<16x32xf32> -> vector<16x32xf32>
    %c296 = arith.constant 296 : index
    %c0_15 = arith.constant 0 : index
    %22 = vector.load %arg0[%c296, %c0_15] : memref<320x64xf32, #tpu.memory_space<vmem>>, vector<1x32xf32>
    %23 = vector.broadcast %22 : vector<1x32xf32> to vector<16x32xf32>
    %24 = arith.addf %21, %23 : vector<16x32xf32>
    %c128 = arith.constant 128 : index
    %c0_16 = arith.constant 0 : index
    %25 = vector.load %arg0[%c128, %c0_16] : memref<320x64xf32, #tpu.memory_space<vmem>>, vector<32x32xf32>
    %cst_17 = arith.constant dense<0.000000e+00> : vector<16x32xf32>
    %26 = tpu.matmul %14, %25, %cst_17 {dimension_numbers = #tpu.dot_dimension_numbers<[1], [0], [0], [1], [0, 0, 1, 1], [], []>} : vector<16x32xf32>, vector<32x32xf32>, vector<16x32xf32> -> vector<16x32xf32>
    %c304 = arith.constant 304 : index
    %c0_18 = arith.constant 0 : index
    %27 = vector.load %arg0[%c304, %c0_18] : memref<320x64xf32, #tpu.memory_space<vmem>>, vector<1x32xf32>
    %28 = vector.broadcast %27 : vector<1x32xf32> to vector<16x32xf32>
    %29 = arith.addf %26, %28 : vector<16x32xf32>
    %c192 = arith.constant 192 : index
    %c0_19 = arith.constant 0 : index
    %30 = vector.load %arg0[%c192, %c0_19] : memref<320x64xf32, #tpu.memory_space<vmem>>, vector<64x32xf32>
    %c192_20 = arith.constant 192 : index
    %c0_21 = arith.constant 0 : index
    %31 = vector.load %arg0[%c192_20, %c0_21] : memref<320x64xf32, #tpu.memory_space<vmem>>, vector<1x32xf32>
    %c208 = arith.constant 208 : index
    %c0_22 = arith.constant 0 : index
    %32 = vector.load %arg0[%c208, %c0_22] : memref<320x64xf32, #tpu.memory_space<vmem>>, vector<1x32xf32>
    %c224 = arith.constant 224 : index
    %c0_23 = arith.constant 0 : index
    %33 = vector.load %arg0[%c224, %c0_23] : memref<320x64xf32, #tpu.memory_space<vmem>>, vector<1x32xf32>
    %c240 = arith.constant 240 : index
    %c0_24 = arith.constant 0 : index
    %34 = vector.load %arg0[%c240, %c0_24] : memref<320x64xf32, #tpu.memory_space<vmem>>, vector<1x32xf32>
    %35 = vector.broadcast %31 : vector<1x32xf32> to vector<16x32xf32>
    %36 = arith.mulf %24, %35 : vector<16x32xf32>
    %37 = vector.broadcast %32 : vector<1x32xf32> to vector<16x32xf32>
    %38 = arith.mulf %24, %37 : vector<16x32xf32>
    %39 = vector.broadcast %33 : vector<1x32xf32> to vector<16x32xf32>
    %40 = arith.mulf %24, %39 : vector<16x32xf32>
    %41 = vector.broadcast %34 : vector<1x32xf32> to vector<16x32xf32>
    %42 = arith.mulf %24, %41 : vector<16x32xf32>
    %43 = tpu.concatenate %36, %38, %40, %42 in 0 : vector<16x32xf32>, vector<16x32xf32>, vector<16x32xf32>, vector<16x32xf32> -> vector<64x32xf32>
    %44 = vector.broadcast %31 : vector<1x32xf32> to vector<16x32xf32>
    %45 = arith.mulf %29, %44 : vector<16x32xf32>
    %46 = vector.broadcast %32 : vector<1x32xf32> to vector<16x32xf32>
    %47 = arith.mulf %29, %46 : vector<16x32xf32>
    %48 = vector.broadcast %33 : vector<1x32xf32> to vector<16x32xf32>
    %49 = arith.mulf %29, %48 : vector<16x32xf32>
    %50 = vector.broadcast %34 : vector<1x32xf32> to vector<16x32xf32>
    %51 = arith.mulf %29, %50 : vector<16x32xf32>
    %52 = tpu.concatenate %45, %47, %49, %51 in 0 : vector<16x32xf32>, vector<16x32xf32>, vector<16x32xf32>, vector<16x32xf32> -> vector<64x32xf32>
    %c256 = arith.constant 256 : index
    %c0_25 = arith.constant 0 : index
    %53 = vector.load %arg0[%c256, %c0_25] : memref<320x64xf32, #tpu.memory_space<vmem>>, vector<16x64xf32>
    %cst_26 = arith.constant dense<0.000000e+00> : vector<16x64xf32>
    %54 = tpu.matmul %19, %43, %cst_26 {dimension_numbers = #tpu.dot_dimension_numbers<[1], [1], [0], [0], [0, 0, 1, 0], [], []>} : vector<16x32xf32>, vector<64x32xf32>, vector<16x64xf32> -> vector<16x64xf32>
    %55 = arith.addf %54, %53 : vector<16x64xf32>
    %cst_27 = arith.constant dense<0xFF800000> : vector<16xf32>
    %56 = vector.multi_reduction <maximumf>, %55, %cst_27 [1] : vector<16x64xf32> to vector<16xf32>
    %57 = vector.shape_cast %56 : vector<16xf32> to vector<16x1xf32>
    %58 = vector.broadcast %57 : vector<16x1xf32> to vector<16x64xf32>
    %59 = arith.subf %55, %58 : vector<16x64xf32>
    %60 = math.exp %59 : vector<16x64xf32>
    %cst_28 = arith.constant dense<0.000000e+00> : vector<16x32xf32>
    %61 = tpu.matmul %60, %52, %cst_28 {dimension_numbers = #tpu.dot_dimension_numbers<[1], [0], [0], [1], [0, 0, 1, 1], [], []>} : vector<16x64xf32>, vector<64x32xf32>, vector<16x32xf32> -> vector<16x32xf32>
    %cst_29 = arith.constant dense<0.000000e+00> : vector<16x32xf32>
    %62 = tpu.matmul %60, %30, %cst_29 {dimension_numbers = #tpu.dot_dimension_numbers<[1], [0], [0], [1], [0, 0, 1, 1], [], []>} : vector<16x64xf32>, vector<64x32xf32>, vector<16x32xf32> -> vector<16x32xf32>
    %63 = tpu.reciprocal %62 {approx = true} : vector<16x32xf32> -> vector<16x32xf32>
    %64 = arith.mulf %62, %63 : vector<16x32xf32>
    %cst_30 = arith.constant 2.000000e+00 : f32
    %65 = vector.broadcast %cst_30 : f32 to vector<16x32xf32>
    %66 = arith.subf %65, %64 : vector<16x32xf32>
    %67 = arith.mulf %63, %66 : vector<16x32xf32>
    %68 = arith.mulf %61, %67 : vector<16x32xf32>
    %c160 = arith.constant 160 : index
    %c0_31 = arith.constant 0 : index
    %69 = vector.load %arg0[%c160, %c0_31] : memref<320x64xf32, #tpu.memory_space<vmem>>, vector<32x32xf32>
    %cst_32 = arith.constant dense<0.000000e+00> : vector<16x32xf32>
    %70 = tpu.matmul %68, %69, %cst_32 {dimension_numbers = #tpu.dot_dimension_numbers<[1], [0], [0], [1], [0, 0, 1, 1], [], []>} : vector<16x32xf32>, vector<32x32xf32>, vector<16x32xf32> -> vector<16x32xf32>
    %c312 = arith.constant 312 : index
    %c0_33 = arith.constant 0 : index
    %71 = vector.load %arg0[%c312, %c0_33] : memref<320x64xf32, #tpu.memory_space<vmem>>, vector<1x32xf32>
    %72 = vector.broadcast %71 : vector<1x32xf32> to vector<16x32xf32>
    %73 = arith.addf %70, %72 : vector<16x32xf32>
    %74 = arith.addf %73, %0 : vector<16x32xf32>
    %c0_34 = arith.constant 0 : index
    %c0_35 = arith.constant 0 : index
    %75 = vector.load %arg3[%c0_34, %c0_35] : memref<16x32xf32, #tpu.memory_space<vmem>>, vector<16x32xf32>
    tpu.vector_store %arg3[%c0_34, %c0_35], %74 {strides = array<i32>} : memref<16x32xf32, #tpu.memory_space<vmem>>, vector<16x32xf32>,
    return
  }
}

</mosaic_0001>

<llo_original>
// kernel: context_enhancer.1
$region0: #{context_enhancer.1}
  #allocation0 [shape = 'u32[]', space=smem, size = 0x4, offset = 0x4, fixed_abs, tag = 'smem constant byte address 0x4 - core index']
  #allocation1 [shape = 'u32[144,128]{1,0:T(1,128)}', space=vmem, size = 0x12000, scoped, tag = 'internal scratch']
  %s0 = inlined_call_operand.vmem [shape: f32[320,64], index: 0, kind: input, shape index: {}]
  %s1 = inlined_call_operand.vmem [shape: f32[16,32], index: 1, kind: input, shape index: {}]
  %s2 = inlined_call_operand.vmem [shape: f32[16,8], index: 2, kind: input, shape index: {}]
  %s3 = inlined_call_operand.hbm [shape: f32[16,32], index: 3, kind: output, shape index: {}]
  %s4 = sld [smem:[#allocation0]]
  $region22: #{context_enhancer.1} parent=0
    _
  %s6 = ssub.s32 1, %s4
  %s7 = scalar_select 0, %s6, %s4
  $region1: #{context_enhancer.1} parent=0
    #allocation2 [shape = 'u8[8192]{0}', space=vmem, size = 0x2000, scoped, tag = 'output window, operand 0, single buffered']
    #allocation3 [shape = 's32[1]{0}', space=sflag, size = 0x4, scoped, tag = 'scoped memory for context_enhancer.1']
    %8 = vsyncpa [#allocation3], 0
    // Predicated region
    $region2: #{context_enhancer.1} parent=1 // pred_check
      _
    $region3: #{context_enhancer.1} parent=1 // pred_check_branch
      %10 = sbr.rel (0) target = $region5
    $region4: #{context_enhancer.1} parent=1 // pred_region
      _
    $region5: #{context_enhancer.1} parent=1 // pred_fallthru
      _
    // Predicated region
    $region6: #{context_enhancer.1} parent=1 // pred_check
      _
    $region7: #{context_enhancer.1} parent=1 // pred_check_branch
      %12 = sbr.rel (0) target = $region9
    $region8: #{context_enhancer.1} parent=1 // pred_region
      _
    $region9: #{context_enhancer.1} parent=1 // pred_fallthru
      _
    // Predicated region
    $region10: #{context_enhancer.1} parent=1 // pred_check
      _
    $region11: #{context_enhancer.1} parent=1 // pred_check_branch
      %14 = sbr.rel (0) target = $region13
    $region12: #{context_enhancer.1} parent=1 // pred_region
      _
    $region13: #{context_enhancer.1} parent=1 // pred_fallthru
      _
    %v15 = vld [vmem:[%s1] sm:$0xff]
    %v16 = vld [vmem:[%s1 + $0x8] sm:$0xff]
    %v17 = vld [vmem:[%s2] sm:$0xff]
    %v18 = vld [vmem:[%s2 + $0x8] sm:$0xff]
    %v19 = vld [vmem:[%s0] sm:$0xff]
    %v20 = vld [vmem:[%s0 + $0x110] sm:$0x1]
    %v21 = vlaneseq
    %v22 = vshrl.u32 %v21, 7
    %v23 = vsub.s32 0, %v22
    %v24 = vrot.slane %v20, %v23
    %vm25 = vcmask 64512
    %v27 = vsel %vm25, %v17, 0
    %v30 = vsel %vm25, %v18, 0
    %32 = vmatprep.subr.mxu0 0.0
    %33 = vmatpush1.msra.mxu0 %v19
    %34 = vmatprep.subr.mxu0 0.0
    %35 = vmatpush1.msra.mxu0 0.0
    %36 = vmatprep.subr.mxu0 0.0
    %37 = vmatpush1.msra.mxu0 0.0
    %38 = vmatprep.subr.mxu0 0.0
    %39 = vmatpush1.msra.mxu0 0.0
    %40 = vmatprep.subr.mxu0 0.0
    %41 = vmatpush1.msra.mxu0 0.0
    %42 = vmatprep.subr.mxu0 0.0
    %43 = vmatpush1.msra.mxu0 0.0
    %44 = vmatprep.subr.mxu0 0.0
    %45 = vmatpush1.msra.mxu0 0.0
    %46 = vmatprep.subr.mxu0 0.0
    %47 = vmatpush1.msra.mxu0 0.0
    %48 = vmatprep.subr.mxu0 0.0
    %49 = vmatpush1.msra.mxu0 0.0
    %50 = vmatprep.subr.mxu0 0.0
    %51 = vmatpush1.msra.mxu0 0.0
    %52 = vmatprep.subr.mxu0 0.0
    %53 = vmatpush1.msra.mxu0 0.0
    %54 = vmatprep.subr.mxu0 0.0
    %55 = vmatpush1.msra.mxu0 0.0
    %56 = vmatprep.subr.mxu0 0.0
    %57 = vmatpush1.msra.mxu0 0.0
    %58 = vmatprep.subr.mxu0 0.0
    %59 = vmatpush1.msra.mxu0 0.0
    %60 = vmatprep.subr.mxu0 0.0
    %61 = vmatpush1.msra.mxu0 0.0
    %62 = vmatprep.subr.mxu0 0.0
    %63 = vmatpush1.msra.mxu0 0.0
    %64 = vmatprep.subr.mxu0 0.0
    %65 = vmatpush1.msra.mxu0 0.0
    %66 = vmatprep.subr.mxu0 0.0
    %67 = vmatpush1.msra.mxu0 0.0
    %68 = vmatprep.subr.mxu0 0.0
    %69 = vmatpush1.msra.mxu0 0.0
    %70 = vmatprep.subr.mxu0 0.0
    %71 = vmatpush1.msra.mxu0 0.0
    %72 = vmatprep.subr.mxu0 0.0
    %73 = vmatpush1.msra.mxu0 0.0
    %74 = vmatprep.subr.mxu0 0.0
    %75 = vmatpush1.msra.mxu0 0.0
    %76 = vmatprep.subr.mxu0 0.0
    %77 = vmatpush1.msra.mxu0 0.0
    %78 = vmatprep.subr.mxu0 0.0
    %79 = vmatpush1.msra.mxu0 0.0
    %80 = vmatprep.subr.mxu0 0.0
    %81 = vmatpush1.msra.mxu0 0.0
    %82 = vmatprep.subr.mxu0 0.0
    %83 = vmatpush1.msra.mxu0 0.0
    %84 = vmatprep.subr.mxu0 0.0
    %85 = vmatpush1.msra.mxu0 0.0
    %86 = vmatprep.subr.mxu0 0.0
    %87 = vmatpush1.msra.mxu0 0.0
    %88 = vmatprep.subr.mxu0 0.0
    %89 = vmatpush1.msra.mxu0 0.0
    %90 = vmatprep.subr.mxu0 0.0
    %91 = vmatpush1.msra.mxu0 0.0
    %92 = vmatprep.subr.mxu0 0.0
    %93 = vmatpush1.msra.mxu0 0.0
    %94 = vmatprep.subr.mxu0 0.0
    %95 = vmatpush1.msra.mxu0 0.0
    %96 = vmatprep.mubr.f32.mxu0 0.0
    %97 = vmatmul.mubr.f32.gmra.mrb[0].mxu0 %v27
    %v98 = vpop.f32.mrb[0].mxu0
    %v99 = vadd.f32 %v24, %v98
    %v100 = vpop.f32.mrb[0].mxu0
    %101 = vmatprep.mubr.f32.mxu0 0.0
    %102 = vmatmul.mubr.f32.gmra.mrb[0].mxu0 %v30
    %v103 = vpop.f32.mrb[0].mxu0
    %v104 = vadd.f32 %v24, %v103
    %v105 = vpop.f32.mrb[0].mxu0
    %106 = vdwg.mxu0
    %v107 = vmax.f32 %v99, 0.0
    %v108 = vmax.f32 %v104, 0.0
    %v109 = vld [vmem:[%s0 + $0x20] sm:$0xff]
    %v110 = vld [vmem:[%s0 + $0x28] sm:$0xff]
    %v111 = vld [vmem:[%s0 + $0x118] sm:$0x1]
    %v112 = vlaneseq
    %v113 = vshrl.u32 %v112, 7
    %v114 = vsub.s32 0, %v113
    %v115 = vrot.slane %v111, %v114
    %vm116 = vcmask 130048
    %v118 = vsel %vm116, %v107, 0
    %v121 = vsel %vm116, %v108, 0
    %123 = vmatprep.subr.mxu0 0.0
    %124 = vmatpush1.msra.mxu0 %v109
    %125 = vmatprep.subr.mxu0 0.0
    %126 = vmatpush1.msra.mxu0 %v110
    %127 = vmatprep.subr.mxu0 0.0
    %128 = vmatpush1.msra.mxu0 0.0
    %129 = vmatprep.subr.mxu0 0.0
    %130 = vmatpush1.msra.mxu0 0.0
    %131 = vmatprep.subr.mxu0 0.0
    %132 = vmatpush1.msra.mxu0 0.0
    %133 = vmatprep.subr.mxu0 0.0
    %134 = vmatpush1.msra.mxu0 0.0
    %135 = vmatprep.subr.mxu0 0.0
    %136 = vmatpush1.msra.mxu0 0.0
    %137 = vmatprep.subr.mxu0 0.0
    %138 = vmatpush1.msra.mxu0 0.0
    %139 = vmatprep.subr.mxu0 0.0
    %140 = vmatpush1.msra.mxu0 0.0
    %141 = vmatprep.subr.mxu0 0.0
    %142 = vmatpush1.msra.mxu0 0.0
    %143 = vmatprep.subr.mxu0 0.0
    %144 = vmatpush1.msra.mxu0 0.0
    %145 = vmatprep.subr.mxu0 0.0
    %146 = vmatpush1.msra.mxu0 0.0
    %147 = vmatprep.subr.mxu0 0.0
    %148 = vmatpush1.msra.mxu0 0.0
    %149 = vmatprep.subr.mxu0 0.0
    %150 = vmatpush1.msra.mxu0 0.0
    %151 = vmatprep.subr.mxu0 0.0
    %152 = vmatpush1.msra.mxu0 0.0
    %153 = vmatprep.subr.mxu0 0.0
    %154 = vmatpush1.msra.mxu0 0.0
    %155 = vmatprep.subr.mxu0 0.0
    %156 = vmatpush1.msra.mxu0 0.0
    %157 = vmatprep.subr.mxu0 0.0
    %158 = vmatpush1.msra.mxu0 0.0
    %159 = vmatprep.subr.mxu0 0.0
    %160 = vmatpush1.msra.mxu0 0.0
    %161 = vmatprep.subr.mxu0 0.0
    %162 = vmatpush1.msra.mxu0 0.0
    %163 = vmatprep.subr.mxu0 0.0
    %164 = vmatpush1.msra.mxu0 0.0
    %165 = vmatprep.subr.mxu0 0.0
    %166 = vmatpush1.msra.mxu0 0.0
    %167 = vmatprep.subr.mxu0 0.0
    %168 = vmatpush1.msra.mxu0 0.0
    %169 = vmatprep.subr.mxu0 0.0
    %170 = vmatpush1.msra.mxu0 0.0
    %171 = vmatprep.subr.mxu0 0.0
    %172 = vmatpush1.msra.mxu0 0.0
    %173 = vmatprep.subr.mxu0 0.0
    %174 = vmatpush1.msra.mxu0 0.0
    %175 = vmatprep.subr.mxu0 0.0
    %176 = vmatpush1.msra.mxu0 0.0
    %177 = vmatprep.subr.mxu0 0.0
    %178 = vmatpush1.msra.mxu0 0.0
    %179 = vmatprep.subr.mxu0 0.0
    %180 = vmatpush1.msra.mxu0 0.0
    %181 = vmatprep.subr.mxu0 0.0
    %182 = vmatpush1.msra.mxu0 0.0
    %183 = vmatprep.subr.mxu0 0.0
    %184 = vmatpush1.msra.mxu0 0.0
    %185 = vmatprep.subr.mxu0 0.0
    %186 = vmatpush1.msra.mxu0 0.0
    %187 = vmatprep.mubr.f32.mxu0 0.0
    %188 = vmatmul.mubr.f32.gmra.mrb[0].mxu0 %v118
    %v189 = vpop.f32.mrb[0].mxu0
    %v190 = vadd.f32 %v115, %v189
    %v191 = vpop.f32.mrb[0].mxu0
    %192 = vmatprep.mubr.f32.mxu0 0.0
    %193 = vmatmul.mubr.f32.gmra.mrb[0].mxu0 %v121
    %v194 = vpop.f32.mrb[0].mxu0
    %v195 = vadd.f32 %v115, %v194
    %v196 = vpop.f32.mrb[0].mxu0
    %197 = vdwg.mxu0
    %v198 = vtanh.pop %v190
    %v199 = vtanh.pop %v195
    %v200 = vld [vmem:[%s0 + $0x40] sm:$0xff]
    %v201 = vld [vmem:[%s0 + $0x48] sm:$0xff]
    %v202 = vld [vmem:[%s0 + $0x50] sm:$0xff]
    %v203 = vld [vmem:[%s0 + $0x58] sm:$0xff]
    %v204 = vld [vmem:[%s0 + $0x120] sm:$0x1]
    %v205 = vlaneseq
    %v206 = vshrl.u32 %v205, 7
    %v207 = vsub.s32 0, %v206
    %v208 = vrot.slane %v204, %v207
    %vm209 = vcmask 261120
    %v211 = vsel %vm209, %v15, 0
    %v214 = vsel %vm209, %v16, 0
    %216 = vmatprep.subr.mxu0 0.0
    %217 = vmatpush1.msra.mxu0 %v200
    %218 = vmatprep.subr.mxu0 0.0
    %219 = vmatpush1.msra.mxu0 %v201
    %220 = vmatprep.subr.mxu0 0.0
    %221 = vmatpush1.msra.mxu0 %v202
    %222 = vmatprep.subr.mxu0 0.0
    %223 = vmatpush1.msra.mxu0 %v203
    %224 = vmatprep.subr.mxu0 0.0
    %225 = vmatpush1.msra.mxu0 0.0
    %226 = vmatprep.subr.mxu0 0.0
    %227 = vmatpush1.msra.mxu0 0.0
    %228 = vmatprep.subr.mxu0 0.0
    %229 = vmatpush1.msra.mxu0 0.0
    %230 = vmatprep.subr.mxu0 0.0
    %231 = vmatpush1.msra.mxu0 0.0
    %232 = vmatprep.subr.mxu0 0.0
    %233 = vmatpush1.msra.mxu0 0.0
    %234 = vmatprep.subr.mxu0 0.0
    %235 = vmatpush1.msra.mxu0 0.0
    %236 = vmatprep.subr.mxu0 0.0
    %237 = vmatpush1.msra.mxu0 0.0
    %238 = vmatprep.subr.mxu0 0.0
    %239 = vmatpush1.msra.mxu0 0.0
    %240 = vmatprep.subr.mxu0 0.0
    %241 = vmatpush1.msra.mxu0 0.0
    %242 = vmatprep.subr.mxu0 0.0
    %243 = vmatpush1.msra.mxu0 0.0
    %244 = vmatprep.subr.mxu0 0.0
    %245 = vmatpush1.msra.mxu0 0.0
    %246 = vmatprep.subr.mxu0 0.0
    %247 = vmatpush1.msra.mxu0 0.0
    %248 = vmatprep.subr.mxu0 0.0
    %249 = vmatpush1.msra.mxu0 0.0
    %250 = vmatprep.subr.mxu0 0.0
    %251 = vmatpush1.msra.mxu0 0.0
    %252 = vmatprep.subr.mxu0 0.0
    %253 = vmatpush1.msra.mxu0 0.0
    %254 = vmatprep.subr.mxu0 0.0
    %255 = vmatpush1.msra.mxu0 0.0
    %256 = vmatprep.subr.mxu0 0.0
    %257 = vmatpush1.msra.mxu0 0.0
    %258 = vmatprep.subr.mxu0 0.0
    %259 = vmatpush1.msra.mxu0 0.0
    %260 = vmatprep.subr.mxu0 0.0
    %261 = vmatpush1.msra.mxu0 0.0
    %262 = vmatprep.subr.mxu0 0.0
    %263 = vmatpush1.msra.mxu0 0.0
    %264 = vmatprep.subr.mxu0 0.0
    %265 = vmatpush1.msra.mxu0 0.0
    %266 = vmatprep.subr.mxu0 0.0
    %267 = vmatpush1.msra.mxu0 0.0
    %268 = vmatprep.subr.mxu0 0.0
    %269 = vmatpush1.msra.mxu0 0.0
    %270 = vmatprep.subr.mxu0 0.0
    %271 = vmatpush1.msra.mxu0 0.0
    %272 = vmatprep.subr.mxu0 0.0
    %273 = vmatpush1.msra.mxu0 0.0
    %274 = vmatprep.subr.mxu0 0.0
    %275 = vmatpush1.msra.mxu0 0.0
    %276 = vmatprep.subr.mxu0 0.0
    %277 = vmatpush1.msra.mxu0 0.0
    %278 = vmatprep.subr.mxu0 0.0
    %279 = vmatpush1.msra.mxu0 0.0
    %280 = vmatprep.mubr.f32.mxu0 0.0
    %281 = vmatmul.mubr.f32.gmra.mrb[0].mxu0 %v211
    %v282 = vpop.f32.mrb[0].mxu0
    %v283 = vadd.f32 %v208, %v282
    %v284 = vpop.f32.mrb[0].mxu0
    %285 = vmatprep.mubr.f32.mxu0 0.0
    %286 = vmatmul.mubr.f32.gmra.mrb[0].mxu0 %v214
    %v287 = vpop.f32.mrb[0].mxu0
    %v288 = vadd.f32 %v208, %v287
    %v289 = vpop.f32.mrb[0].mxu0
    %290 = vdwg.mxu0
    %v291 = vld [vmem:[%s0 + $0x60] sm:$0xff]
    %v292 = vld [vmem:[%s0 + $0x68] sm:$0xff]
    %v293 = vld [vmem:[%s0 + $0x70] sm:$0xff]
    %v294 = vld [vmem:[%s0 + $0x78] sm:$0xff]
    %v295 = vld [vmem:[%s0 + $0x128] sm:$0x1]
    %v296 = vlaneseq
    %v297 = vshrl.u32 %v296, 7
    %v298 = vsub.s32 0, %v297
    %v299 = vrot.slane %v295, %v298
    %v301 = vsel %vm209, %v198, 0
    %v304 = vsel %vm209, %v199, 0
    %306 = vmatprep.subr.mxu0 0.0
    %307 = vmatpush1.msra.mxu0 %v291
    %308 = vmatprep.subr.mxu0 0.0
    %309 = vmatpush1.msra.mxu0 %v292
    %310 = vmatprep.subr.mxu0 0.0
    %311 = vmatpush1.msra.mxu0 %v293
    %312 = vmatprep.subr.mxu0 0.0
    %313 = vmatpush1.msra.mxu0 %v294
    %314 = vmatprep.subr.mxu0 0.0
    %315 = vmatpush1.msra.mxu0 0.0
    %316 = vmatprep.subr.mxu0 0.0
    %317 = vmatpush1.msra.mxu0 0.0
    %318 = vmatprep.subr.mxu0 0.0
    %319 = vmatpush1.msra.mxu0 0.0
    %320 = vmatprep.subr.mxu0 0.0
    %321 = vmatpush1.msra.mxu0 0.0
    %322 = vmatprep.subr.mxu0 0.0
    %323 = vmatpush1.msra.mxu0 0.0
    %324 = vmatprep.subr.mxu0 0.0
    %325 = vmatpush1.msra.mxu0 0.0
    %326 = vmatprep.subr.mxu0 0.0
    %327 = vmatpush1.msra.mxu0 0.0
    %328 = vmatprep.subr.mxu0 0.0
    %329 = vmatpush1.msra.mxu0 0.0
    %330 = vmatprep.subr.mxu0 0.0
    %331 = vmatpush1.msra.mxu0 0.0
    %332 = vmatprep.subr.mxu0 0.0
    %333 = vmatpush1.msra.mxu0 0.0
    %334 = vmatprep.subr.mxu0 0.0
    %335 = vmatpush1.msra.mxu0 0.0
    %336 = vmatprep.subr.mxu0 0.0
    %337 = vmatpush1.msra.mxu0 0.0
    %338 = vmatprep.subr.mxu0 0.0
    %339 = vmatpush1.msra.mxu0 0.0
    %340 = vmatprep.subr.mxu0 0.0
    %341 = vmatpush1.msra.mxu0 0.0
    %342 = vmatprep.subr.mxu0 0.0
    %343 = vmatpush1.msra.mxu0 0.0
    %344 = vmatprep.subr.mxu0 0.0
    %345 = vmatpush1.msra.mxu0 0.0
    %346 = vmatprep.subr.mxu0 0.0
    %347 = vmatpush1.msra.mxu0 0.0
    %348 = vmatprep.subr.mxu0 0.0
    %349 = vmatpush1.msra.mxu0 0.0
    %350 = vmatprep.subr.mxu0 0.0
    %351 = vmatpush1.msra.mxu0 0.0
    %352 = vmatprep.subr.mxu0 0.0
    %353 = vmatpush1.msra.mxu0 0.0
    %354 = vmatprep.subr.mxu0 0.0
    %355 = vmatpush1.msra.mxu0 0.0
    %356 = vmatprep.subr.mxu0 0.0
    %357 = vmatpush1.msra.mxu0 0.0
    %358 = vmatprep.subr.mxu0 0.0
    %359 = vmatpush1.msra.mxu0 0.0
    %360 = vmatprep.subr.mxu0 0.0
    %361 = vmatpush1.msra.mxu0 0.0
    %362 = vmatprep.subr.mxu0 0.0
    %363 = vmatpush1.msra.mxu0 0.0
    %364 = vmatprep.subr.mxu0 0.0
    %365 = vmatpush1.msra.mxu0 0.0
    %366 = vmatprep.subr.mxu0 0.0
    %367 = vmatpush1.msra.mxu0 0.0
    %368 = vmatprep.subr.mxu0 0.0
    %369 = vmatpush1.msra.mxu0 0.0
    %370 = vmatprep.mubr.f32.mxu0 0.0
    %371 = vmatmul.mubr.f32.gmra.mrb[0].mxu0 %v301
    %v372 = vpop.f32.mrb[0].mxu0
    %v373 = vadd.f32 %v299, %v372
    %v374 = vpop.f32.mrb[0].mxu0
    %375 = vmatprep.mubr.f32.mxu0 0.0
    %376 = vmatmul.mubr.f32.gmra.mrb[0].mxu0 %v304
    %v377 = vpop.f32.mrb[0].mxu0
    %v378 = vadd.f32 %v299, %v377
    %v379 = vpop.f32.mrb[0].mxu0
    %380 = vdwg.mxu0
    %v381 = vld [vmem:[%s0 + $0x80] sm:$0xff]
    %v382 = vld [vmem:[%s0 + $0x88] sm:$0xff]
    %v383 = vld [vmem:[%s0 + $0x90] sm:$0xff]
    %v384 = vld [vmem:[%s0 + $0x98] sm:$0xff]
    %v385 = vld [vmem:[%s0 + $0x130] sm:$0x1]
    %v386 = vlaneseq
    %v387 = vshrl.u32 %v386, 7
    %v388 = vsub.s32 0, %v387
    %v389 = vrot.slane %v385, %v388
    %390 = vmatprep.subr.mxu0 0.0
    %391 = vmatpush1.msra.mxu0 %v381
    %392 = vmatprep.subr.mxu0 0.0
    %393 = vmatpush1.msra.mxu0 %v382
    %394 = vmatprep.subr.mxu0 0.0
    %395 = vmatpush1.msra.mxu0 %v383
    %396 = vmatprep.subr.mxu0 0.0
    %397 = vmatpush1.msra.mxu0 %v384
    %398 = vmatprep.subr.mxu0 0.0
    %399 = vmatpush1.msra.mxu0 0.0
    %400 = vmatprep.subr.mxu0 0.0
    %401 = vmatpush1.msra.mxu0 0.0
    %402 = vmatprep.subr.mxu0 0.0
    %403 = vmatpush1.msra.mxu0 0.0
    %404 = vmatprep.subr.mxu0 0.0
    %405 = vmatpush1.msra.mxu0 0.0
    %406 = vmatprep.subr.mxu0 0.0
    %407 = vmatpush1.msra.mxu0 0.0
    %408 = vmatprep.subr.mxu0 0.0
    %409 = vmatpush1.msra.mxu0 0.0
    %410 = vmatprep.subr.mxu0 0.0
    %411 = vmatpush1.msra.mxu0 0.0
    %412 = vmatprep.subr.mxu0 0.0
    %413 = vmatpush1.msra.mxu0 0.0
    %414 = vmatprep.subr.mxu0 0.0
    %415 = vmatpush1.msra.mxu0 0.0
    %416 = vmatprep.subr.mxu0 0.0
    %417 = vmatpush1.msra.mxu0 0.0
    %418 = vmatprep.subr.mxu0 0.0
    %419 = vmatpush1.msra.mxu0 0.0
    %420 = vmatprep.subr.mxu0 0.0
    %421 = vmatpush1.msra.mxu0 0.0
    %422 = vmatprep.subr.mxu0 0.0
    %423 = vmatpush1.msra.mxu0 0.0
    %424 = vmatprep.subr.mxu0 0.0
    %425 = vmatpush1.msra.mxu0 0.0
    %426 = vmatprep.subr.mxu0 0.0
    %427 = vmatpush1.msra.mxu0 0.0
    %428 = vmatprep.subr.mxu0 0.0
    %429 = vmatpush1.msra.mxu0 0.0
    %430 = vmatprep.subr.mxu0 0.0
    %431 = vmatpush1.msra.mxu0 0.0
    %432 = vmatprep.subr.mxu0 0.0
    %433 = vmatpush1.msra.mxu0 0.0
    %434 = vmatprep.subr.mxu0 0.0
    %435 = vmatpush1.msra.mxu0 0.0
    %436 = vmatprep.subr.mxu0 0.0
    %437 = vmatpush1.msra.mxu0 0.0
    %438 = vmatprep.subr.mxu0 0.0
    %439 = vmatpush1.msra.mxu0 0.0
    %440 = vmatprep.subr.mxu0 0.0
    %441 = vmatpush1.msra.mxu0 0.0
    %442 = vmatprep.subr.mxu0 0.0
    %443 = vmatpush1.msra.mxu0 0.0
    %444 = vmatprep.subr.mxu0 0.0
    %445 = vmatpush1.msra.mxu0 0.0
    %446 = vmatprep.subr.mxu0 0.0
    %447 = vmatpush1.msra.mxu0 0.0
    %448 = vmatprep.subr.mxu0 0.0
    %449 = vmatpush1.msra.mxu0 0.0
    %450 = vmatprep.subr.mxu0 0.0
    %451 = vmatpush1.msra.mxu0 0.0
    %452 = vmatprep.subr.mxu0 0.0
    %453 = vmatpush1.msra.mxu0 0.0
    %454 = vmatprep.mubr.f32.mxu0 0.0
    %455 = vmatmul.mubr.f32.gmra.mrb[0].mxu0 %v301
    %v456 = vpop.f32.mrb[0].mxu0
    %v457 = vadd.f32 %v389, %v456
    %v458 = vpop.f32.mrb[0].mxu0
    %459 = vmatprep.mubr.f32.mxu0 0.0
    %460 = vmatmul.mubr.f32.gmra.mrb[0].mxu0 %v304
    %v461 = vpop.f32.mrb[0].mxu0
    %v462 = vadd.f32 %v389, %v461
    %v463 = vpop.f32.mrb[0].mxu0
    %464 = vdwg.mxu0
    %v465 = vld [vmem:[%s0 + $0xc0] sm:$0xff]
    %v466 = vld [vmem:[%s0 + $0xc8] sm:$0xff]
    %v467 = vld [vmem:[%s0 + $0xd0] sm:$0xff]
    %v468 = vld [vmem:[%s0 + $0xd8] sm:$0xff]
    %v469 = vld [vmem:[%s0 + $0xe0] sm:$0xff]
    %v470 = vld [vmem:[%s0 + $0xe8] sm:$0xff]
    %v471 = vld [vmem:[%s0 + $0xf0] sm:$0xff]
    %v472 = vld [vmem:[%s0 + $0xf8] sm:$0xff]
    %v473 = vld [vmem:[%s0 + $0xc0] sm:$0x1]
    %v474 = vld [vmem:[%s0 + $0xd0] sm:$0x1]
    %v475 = vld [vmem:[%s0 + $0xe0] sm:$0x1]
    %v476 = vld [vmem:[%s0 + $0xf0] sm:$0x1]
    %v477 = vlaneseq
    %v478 = vshrl.u32 %v477, 7
    %v479 = vsub.s32 0, %v478
    %v480 = vrot.slane %v473, %v479
    %v481 = vmul.f32 %v373, %v480
    %v482 = vmul.f32 %v378, %v480
    %v483 = vlaneseq
    %v484 = vshrl.u32 %v483, 7
    %v485 = vsub.s32 0, %v484
    %v486 = vrot.slane %v474, %v485
    %v487 = vmul.f32 %v373, %v486
    %v488 = vmul.f32 %v378, %v486
    %v489 = vlaneseq
    %v490 = vshrl.u32 %v489, 7
    %v491 = vsub.s32 0, %v490
    %v492 = vrot.slane %v475, %v491
    %v493 = vmul.f32 %v373, %v492
    %v494 = vmul.f32 %v378, %v492
    %v495 = vlaneseq
    %v496 = vshrl.u32 %v495, 7
    %v497 = vsub.s32 0, %v496
    %v498 = vrot.slane %v476, %v497
    %v499 = vmul.f32 %v373, %v498
    %v500 = vmul.f32 %v378, %v498
    %v501 = vmul.f32 %v457, %v480
    %v502 = vmul.f32 %v462, %v480
    %v503 = vmul.f32 %v457, %v486
    %v504 = vmul.f32 %v462, %v486
    %v505 = vmul.f32 %v457, %v492
    %v506 = vmul.f32 %v462, %v492
    %v507 = vmul.f32 %v457, %v498
    %v508 = vmul.f32 %v462, %v498
    %v509 = vld [vmem:[%s0 + $0x100] sm:$0xff]
    %v510 = vld [vmem:[%s0 + $0x108] sm:$0xff]
    %v512 = vsel %vm209, %v283, 0
    %v515 = vsel %vm209, %v288, 0
    %v518 = vsel %vm209, %v481, 0
    %v521 = vsel %vm209, %v482, 0
    %v524 = vsel %vm209, %v487, 0
    %v527 = vsel %vm209, %v488, 0
    %v530 = vsel %vm209, %v493, 0
    %v533 = vsel %vm209, %v494, 0
    %v536 = vsel %vm209, %v499, 0
    %v539 = vsel %vm209, %v500, 0
    %541 = vmatprep.subr.mxu0 0.0
    %542 = vmatpush1.xpose.msra.mxu0 %v518
    %543 = vmatprep.subr.mxu0 0.0
    %544 = vmatpush1.xpose.msra.mxu0 %v521
    %545 = vmatprep.subr.mxu0 0.0
    %546 = vmatpush1.xpose.msra.mxu0 %v524
    %547 = vmatprep.subr.mxu0 0.0
    %548 = vmatpush1.xpose.msra.mxu0 %v527
    %549 = vmatprep.subr.mxu0 0.0
    %550 = vmatpush1.xpose.msra.mxu0 %v530
    %551 = vmatprep.subr.mxu0 0.0
    %552 = vmatpush1.xpose.msra.mxu0 %v533
    %553 = vmatprep.subr.mxu0 0.0
    %554 = vmatpush1.xpose.msra.mxu0 %v536
    %555 = vmatprep.subr.mxu0 0.0
    %556 = vmatpush1.xpose.msra.mxu0 %v539
    %557 = vmatprep.subr.mxu0 0.0
    %558 = vmatpush1.xpose.msra.mxu0 0.0
    %559 = vmatprep.subr.mxu0 0.0
    %560 = vmatpush1.xpose.msra.mxu0 0.0
    %561 = vmatprep.subr.mxu0 0.0
    %562 = vmatpush1.xpose.msra.mxu0 0.0
    %563 = vmatprep.subr.mxu0 0.0
    %564 = vmatpush1.xpose.msra.mxu0 0.0
    %565 = vmatprep.subr.mxu0 0.0
    %566 = vmatpush1.xpose.msra.mxu0 0.0
    %567 = vmatprep.subr.mxu0 0.0
    %568 = vmatpush1.xpose.msra.mxu0 0.0
    %569 = vmatprep.subr.mxu0 0.0
    %570 = vmatpush1.xpose.msra.mxu0 0.0
    %571 = vmatprep.subr.mxu0 0.0
    %572 = vmatpush1.xpose.msra.mxu0 0.0
    %573 = vmatprep.subr.mxu0 0.0
    %574 = vmatpush1.xpose.msra.mxu0 0.0
    %575 = vmatprep.subr.mxu0 0.0
    %576 = vmatpush1.xpose.msra.mxu0 0.0
    %577 = vmatprep.subr.mxu0 0.0
    %578 = vmatpush1.xpose.msra.mxu0 0.0
    %579 = vmatprep.subr.mxu0 0.0
    %580 = vmatpush1.xpose.msra.mxu0 0.0
    %581 = vmatprep.subr.mxu0 0.0
    %582 = vmatpush1.xpose.msra.mxu0 0.0
    %583 = vmatprep.subr.mxu0 0.0
    %584 = vmatpush1.xpose.msra.mxu0 0.0
    %585 = vmatprep.subr.mxu0 0.0
    %586 = vmatpush1.xpose.msra.mxu0 0.0
    %587 = vmatprep.subr.mxu0 0.0
    %588 = vmatpush1.xpose.msra.mxu0 0.0
    %589 = vmatprep.subr.mxu0 0.0
    %590 = vmatpush1.xpose.msra.mxu0 0.0
    %591 = vmatprep.subr.mxu0 0.0
    %592 = vmatpush1.xpose.msra.mxu0 0.0
    %593 = vmatprep.subr.mxu0 0.0
    %594 = vmatpush1.xpose.msra.mxu0 0.0
    %595 = vmatprep.subr.mxu0 0.0
    %596 = vmatpush1.xpose.msra.mxu0 0.0
    %597 = vmatprep.subr.mxu0 0.0
    %598 = vmatpush1.xpose.msra.mxu0 0.0
    %599 = vmatprep.subr.mxu0 0.0
    %600 = vmatpush1.xpose.msra.mxu0 0.0
    %601 = vmatprep.subr.mxu0 0.0
    %602 = vmatpush1.xpose.msra.mxu0 0.0
    %603 = vmatprep.subr.mxu0 0.0
    %604 = vmatpush1.xpose.msra.mxu0 0.0
    %605 = vmatprep.mubr.f32.mxu0 0.0
    %606 = vmatmul.mubr.f32.gmra.mrb[0].mxu0 %v512
    %v607 = vpop.f32.mrb[0].mxu0
    %v608 = vadd.f32 %v509, %v607
    %v609 = vpop.f32.mrb[0].mxu0
    %610 = vmatprep.mubr.f32.mxu0 0.0
    %611 = vmatmul.mubr.f32.gmra.mrb[0].mxu0 %v515
    %v612 = vpop.f32.mrb[0].mxu0
    %v613 = vadd.f32 %v510, %v612
    %v614 = vpop.f32.mrb[0].mxu0
    %615 = vdwg.mxu0
    %vm616 = vcmask 523264
    %v617 = vsel %vm616, %v608, -inf
    %618 = vmax.xlane.f32.xlu0 %v617
    %v619 = vpop.xlane.xlu0 %618
    %v620 = vsel %vm616, %v613, -inf
    %621 = vmax.xlane.f32.xlu0 %v620
    %v622 = vpop.xlane.xlu0 %621
    %v623 = vsub.f32 %v608, %v619
    %v624 = vsub.f32 %v613, %v622
    %v625 = vmul.f32 %v623, 1.442695
    %v626 = vpow.pop %v625
    %v627 = vmul.f32 %v624, 1.442695
    %v628 = vpow.pop %v627
    %v630 = vsel %vm616, %v626, 0
    %v633 = vsel %vm616, %v628, 0
    %635 = vmatprep.subr.mxu0 0.0
    %636 = vmatpush1.msra.mxu0 %v501
    %637 = vmatprep.subr.mxu0 0.0
    %638 = vmatpush1.msra.mxu0 %v502
    %639 = vmatprep.subr.mxu0 0.0
    %640 = vmatpush1.msra.mxu0 %v503
    %641 = vmatprep.subr.mxu0 0.0
    %642 = vmatpush1.msra.mxu0 %v504
    %643 = vmatprep.subr.mxu0 0.0
    %644 = vmatpush1.msra.mxu0 %v505
    %645 = vmatprep.subr.mxu0 0.0
    %646 = vmatpush1.msra.mxu0 %v506
    %647 = vmatprep.subr.mxu0 0.0
    %648 = vmatpush1.msra.mxu0 %v507
    %649 = vmatprep.subr.mxu0 0.0
    %650 = vmatpush1.msra.mxu0 %v508
    %651 = vmatprep.subr.mxu0 0.0
    %652 = vmatpush1.msra.mxu0 0.0
    %653 = vmatprep.subr.mxu0 0.0
    %654 = vmatpush1.msra.mxu0 0.0
    %655 = vmatprep.subr.mxu0 0.0
    %656 = vmatpush1.msra.mxu0 0.0
    %657 = vmatprep.subr.mxu0 0.0
    %658 = vmatpush1.msra.mxu0 0.0
    %659 = vmatprep.subr.mxu0 0.0
    %660 = vmatpush1.msra.mxu0 0.0
    %661 = vmatprep.subr.mxu0 0.0
    %662 = vmatpush1.msra.mxu0 0.0
    %663 = vmatprep.subr.mxu0 0.0
    %664 = vmatpush1.msra.mxu0 0.0
    %665 = vmatprep.subr.mxu0 0.0
    %666 = vmatpush1.msra.mxu0 0.0
    %667 = vmatprep.subr.mxu0 0.0
    %668 = vmatpush1.msra.mxu0 0.0
    %669 = vmatprep.subr.mxu0 0.0
    %670 = vmatpush1.msra.mxu0 0.0
    %671 = vmatprep.subr.mxu0 0.0
    %672 = vmatpush1.msra.mxu0 0.0
    %673 = vmatprep.subr.mxu0 0.0
    %674 = vmatpush1.msra.mxu0 0.0
    %675 = vmatprep.subr.mxu0 0.0
    %676 = vmatpush1.msra.mxu0 0.0
    %677 = vmatprep.subr.mxu0 0.0
    %678 = vmatpush1.msra.mxu0 0.0
    %679 = vmatprep.subr.mxu0 0.0
    %680 = vmatpush1.msra.mxu0 0.0
    %681 = vmatprep.subr.mxu0 0.0
    %682 = vmatpush1.msra.mxu0 0.0
    %683 = vmatprep.subr.mxu0 0.0
    %684 = vmatpush1.msra.mxu0 0.0
    %685 = vmatprep.subr.mxu0 0.0
    %686 = vmatpush1.msra.mxu0 0.0
    %687 = vmatprep.subr.mxu0 0.0
    %688 = vmatpush1.msra.mxu0 0.0
    %689 = vmatprep.subr.mxu0 0.0
    %690 = vmatpush1.msra.mxu0 0.0
    %691 = vmatprep.subr.mxu0 0.0
    %692 = vmatpush1.msra.mxu0 0.0
    %693 = vmatprep.subr.mxu0 0.0
    %694 = vmatpush1.msra.mxu0 0.0
    %695 = vmatprep.subr.mxu0 0.0
    %696 = vmatpush1.msra.mxu0 0.0
    %697 = vmatprep.subr.mxu0 0.0
    %698 = vmatpush1.msra.mxu0 0.0
    %699 = vmatprep.mubr.f32.mxu0 0.0
    %700 = vmatmul.mubr.f32.gmra.mrb[0].mxu0 %v630
    %v701 = vpop.f32.mrb[0].mxu0
    %v702 = vadd.f32 0.0, %v701
    %v703 = vpop.f32.mrb[0].mxu0
    %704 = vmatprep.mubr.f32.mxu0 0.0
    %705 = vmatmul.mubr.f32.gmra.mrb[0].mxu0 %v633
    %v706 = vpop.f32.mrb[0].mxu0
    %v707 = vadd.f32 0.0, %v706
    %v708 = vpop.f32.mrb[0].mxu0
    %709 = vdwg.mxu0
    %710 = vmatprep.subr.mxu0 0.0
    %711 = vmatpush1.msra.mxu0 %v465
    %712 = vmatprep.subr.mxu0 0.0
    %713 = vmatpush1.msra.mxu0 %v466
    %714 = vmatprep.subr.mxu0 0.0
    %715 = vmatpush1.msra.mxu0 %v467
    %716 = vmatprep.subr.mxu0 0.0
    %717 = vmatpush1.msra.mxu0 %v468
    %718 = vmatprep.subr.mxu0 0.0
    %719 = vmatpush1.msra.mxu0 %v469
    %720 = vmatprep.subr.mxu0 0.0
    %721 = vmatpush1.msra.mxu0 %v470
    %722 = vmatprep.subr.mxu0 0.0
    %723 = vmatpush1.msra.mxu0 %v471
    %724 = vmatprep.subr.mxu0 0.0
    %725 = vmatpush1.msra.mxu0 %v472
    %726 = vmatprep.subr.mxu0 0.0
    %727 = vmatpush1.msra.mxu0 0.0
    %728 = vmatprep.subr.mxu0 0.0
    %729 = vmatpush1.msra.mxu0 0.0
    %730 = vmatprep.subr.mxu0 0.0
    %731 = vmatpush1.msra.mxu0 0.0
    %732 = vmatprep.subr.mxu0 0.0
    %733 = vmatpush1.msra.mxu0 0.0
    %734 = vmatprep.subr.mxu0 0.0
    %735 = vmatpush1.msra.mxu0 0.0
    %736 = vmatprep.subr.mxu0 0.0
    %737 = vmatpush1.msra.mxu0 0.0
    %738 = vmatprep.subr.mxu0 0.0
    %739 = vmatpush1.msra.mxu0 0.0
    %740 = vmatprep.subr.mxu0 0.0
    %741 = vmatpush1.msra.mxu0 0.0
    %742 = vmatprep.subr.mxu0 0.0
    %743 = vmatpush1.msra.mxu0 0.0
    %744 = vmatprep.subr.mxu0 0.0
    %745 = vmatpush1.msra.mxu0 0.0
    %746 = vmatprep.subr.mxu0 0.0
    %747 = vmatpush1.msra.mxu0 0.0
    %748 = vmatprep.subr.mxu0 0.0
    %749 = vmatpush1.msra.mxu0 0.0
    %750 = vmatprep.subr.mxu0 0.0
    %751 = vmatpush1.msra.mxu0 0.0
    %752 = vmatprep.subr.mxu0 0.0
    %753 = vmatpush1.msra.mxu0 0.0
    %754 = vmatprep.subr.mxu0 0.0
    %755 = vmatpush1.msra.mxu0 0.0
    %756 = vmatprep.subr.mxu0 0.0
    %757 = vmatpush1.msra.mxu0 0.0
    %758 = vmatprep.subr.mxu0 0.0
    %759 = vmatpush1.msra.mxu0 0.0
    %760 = vmatprep.subr.mxu0 0.0
    %761 = vmatpush1.msra.mxu0 0.0
    %762 = vmatprep.subr.mxu0 0.0
    %763 = vmatpush1.msra.mxu0 0.0
    %764 = vmatprep.subr.mxu0 0.0
    %765 = vmatpush1.msra.mxu0 0.0
    %766 = vmatprep.subr.mxu0 0.0
    %767 = vmatpush1.msra.mxu0 0.0
    %768 = vmatprep.subr.mxu0 0.0
    %769 = vmatpush1.msra.mxu0 0.0
    %770 = vmatprep.subr.mxu0 0.0
    %771 = vmatpush1.msra.mxu0 0.0
    %772 = vmatprep.subr.mxu0 0.0
    %773 = vmatpush1.msra.mxu0 0.0
    %774 = vmatprep.mubr.f32.mxu0 0.0
    %775 = vmatmul.mubr.f32.gmra.mrb[0].mxu0 %v630
    %v776 = vpop.f32.mrb[0].mxu0
    %v777 = vadd.f32 0.0, %v776
    %v778 = vpop.f32.mrb[0].mxu0
    %779 = vmatprep.mubr.f32.mxu0 0.0
    %780 = vmatmul.mubr.f32.gmra.mrb[0].mxu0 %v633
    %v781 = vpop.f32.mrb[0].mxu0
    %v782 = vadd.f32 0.0, %v781
    %v783 = vpop.f32.mrb[0].mxu0
    %784 = vdwg.mxu0
    %v785 = vrcp.pop %v777
    %v786 = vrcp.pop %v782
    %v787 = vmul.f32 %v777, %v785
    %v788 = vmul.f32 %v782, %v786
    %v789 = vsub.f32 2.0, %v787
    %v790 = vsub.f32 2.0, %v788
    %v791 = vmul.f32 %v785, %v789
    %v792 = vmul.f32 %v786, %v790
    %v793 = vmul.f32 %v702, %v791
    %v794 = vmul.f32 %v707, %v792
    %v795 = vld [vmem:[%s0 + $0xa0] sm:$0xff]
    %v796 = vld [vmem:[%s0 + $0xa8] sm:$0xff]
    %v797 = vld [vmem:[%s0 + $0xb0] sm:$0xff]
    %v798 = vld [vmem:[%s0 + $0xb8] sm:$0xff]
    %v799 = vld [vmem:[%s0 + $0x138] sm:$0x1]
    %v800 = vlaneseq
    %v801 = vshrl.u32 %v800, 7
    %v802 = vsub.s32 0, %v801
    %v803 = vrot.slane %v799, %v802
    %v805 = vsel %vm209, %v793, 0
    %v808 = vsel %vm209, %v794, 0
    %810 = vmatprep.subr.mxu0 0.0
    %811 = vmatpush1.msra.mxu0 %v795
    %812 = vmatprep.subr.mxu0 0.0
    %813 = vmatpush1.msra.mxu0 %v796
    %814 = vmatprep.subr.mxu0 0.0
    %815 = vmatpush1.msra.mxu0 %v797
    %816 = vmatprep.subr.mxu0 0.0
    %817 = vmatpush1.msra.mxu0 %v798
    %818 = vmatprep.subr.mxu0 0.0
    %819 = vmatpush1.msra.mxu0 0.0
    %820 = vmatprep.subr.mxu0 0.0
    %821 = vmatpush1.msra.mxu0 0.0
    %822 = vmatprep.subr.mxu0 0.0
    %823 = vmatpush1.msra.mxu0 0.0
    %824 = vmatprep.subr.mxu0 0.0
    %825 = vmatpush1.msra.mxu0 0.0
    %826 = vmatprep.subr.mxu0 0.0
    %827 = vmatpush1.msra.mxu0 0.0
    %828 = vmatprep.subr.mxu0 0.0
    %829 = vmatpush1.msra.mxu0 0.0
    %830 = vmatprep.subr.mxu0 0.0
    %831 = vmatpush1.msra.mxu0 0.0
    %832 = vmatprep.subr.mxu0 0.0
    %833 = vmatpush1.msra.mxu0 0.0
    %834 = vmatprep.subr.mxu0 0.0
    %835 = vmatpush1.msra.mxu0 0.0
    %836 = vmatprep.subr.mxu0 0.0
    %837 = vmatpush1.msra.mxu0 0.0
    %838 = vmatprep.subr.mxu0 0.0
    %839 = vmatpush1.msra.mxu0 0.0
    %840 = vmatprep.subr.mxu0 0.0
    %841 = vmatpush1.msra.mxu0 0.0
    %842 = vmatprep.subr.mxu0 0.0
    %843 = vmatpush1.msra.mxu0 0.0
    %844 = vmatprep.subr.mxu0 0.0
    %845 = vmatpush1.msra.mxu0 0.0
    %846 = vmatprep.subr.mxu0 0.0
    %847 = vmatpush1.msra.mxu0 0.0
    %848 = vmatprep.subr.mxu0 0.0
    %849 = vmatpush1.msra.mxu0 0.0
    %850 = vmatprep.subr.mxu0 0.0
    %851 = vmatpush1.msra.mxu0 0.0
    %852 = vmatprep.subr.mxu0 0.0
    %853 = vmatpush1.msra.mxu0 0.0
    %854 = vmatprep.subr.mxu0 0.0
    %855 = vmatpush1.msra.mxu0 0.0
    %856 = vmatprep.subr.mxu0 0.0
    %857 = vmatpush1.msra.mxu0 0.0
    %858 = vmatprep.subr.mxu0 0.0
    %859 = vmatpush1.msra.mxu0 0.0
    %860 = vmatprep.subr.mxu0 0.0
    %861 = vmatpush1.msra.mxu0 0.0
    %862 = vmatprep.subr.mxu0 0.0
    %863 = vmatpush1.msra.mxu0 0.0
    %864 = vmatprep.subr.mxu0 0.0
    %865 = vmatpush1.msra.mxu0 0.0
    %866 = vmatprep.subr.mxu0 0.0
    %867 = vmatpush1.msra.mxu0 0.0
    %868 = vmatprep.subr.mxu0 0.0
    %869 = vmatpush1.msra.mxu0 0.0
    %870 = vmatprep.subr.mxu0 0.0
    %871 = vmatpush1.msra.mxu0 0.0
    %872 = vmatprep.subr.mxu0 0.0
    %873 = vmatpush1.msra.mxu0 0.0
    %874 = vmatprep.mubr.f32.mxu0 0.0
    %875 = vmatmul.mubr.f32.gmra.mrb[0].mxu0 %v805
    %v876 = vpop.f32.mrb[0].mxu0
    %v877 = vadd.f32 %v803, %v876
    %v878 = vpop.f32.mrb[0].mxu0
    %879 = vmatprep.mubr.f32.mxu0 0.0
    %880 = vmatmul.mubr.f32.gmra.mrb[0].mxu0 %v808
    %v881 = vpop.f32.mrb[0].mxu0
    %v882 = vadd.f32 %v803, %v881
    %v883 = vpop.f32.mrb[0].mxu0
    %884 = vdwg.mxu0
    %v885 = vadd.f32 %v877, %v15
    %v886 = vadd.f32 %v882, %v16
    %887 = vst.msk [vmem:[#allocation2] sm:$0xff] %vm209, %v885
    %888 = vst.msk [vmem:[#allocation2 + $0x8] sm:$0xff] %vm209, %v886
    // Predicated region
    $region14: #{context_enhancer.1} parent=1 // pred_check
      _
    $region15: #{context_enhancer.1} parent=1 // pred_check_branch
      %890 = sbr.rel (0) target = $region17
    $region16: #{context_enhancer.1} parent=1 // pred_region
      %s892 = ssub.s32 256, 256
      %893 = vsyncadd [#allocation3], %s892
      %s894 = sshll.u32 [#allocation2], 4
      %s895 = int_to_ptr.vmem [resolvable:$true] %s894
      %900 = dma.vmem_to_hbm [thread:$0]  %s895, 256, %s3, [#allocation3], 128, 128, 8
    $region17: #{context_enhancer.1} parent=1 // pred_fallthru
      _
    // Predicated region
    $region18: #{context_enhancer.1} parent=1 // pred_check
      _
    $region19: #{context_enhancer.1} parent=1 // pred_check_branch
      %902 = sbr.rel (0) target = $region21
    $region20: #{context_enhancer.1} parent=1 // pred_region
      %903 = dma.done [#allocation3], 256
    $region21: #{context_enhancer.1} parent=1 // pred_fallthru
      _
    %904 = vsyncpa [#allocation3], 1

</llo_original>
